<compile_context>
chip_gen: v5e
topology: v5e:2x2
jax: 0.10.0
libtpu: 0.0.40
codegen_flags: <defaults>
</compile_context>

<pallas_src>
import functools
import math

import jax
import jax.numpy as jnp
from jax.experimental import pallas as pl
from jax.experimental.pallas import tpu as pltpu


# --------------------------------------------------------------------------- #
# Kernels
# --------------------------------------------------------------------------- #
def _packed_kernel(x_ref, fb_ref, sin_ref, cos_ref, *, r):
    # x_ref:   (TG, r)    f32  -- r consecutive batch timesteps per packed row
    # fb_ref:  (r, Wh)    f32  -- row j: freq in lanes [j*hd, (j+1)*hd), 0 elsewhere
    # sin_ref: (TG, Wh)   f32
    # cos_ref: (TG, Wh)   f32
    xv = x_ref[...]
    # phase[g, l] = x[g*r + l//hd] * freq[l % hd]  (exact: the only non-zero term
    # is the same single f32 multiply as the reference; adding 0.0 is exact).
    phase = xv[:, 0:1] * fb_ref[0:1, :]
    for j in range(1, r):
        phase = phase + xv[:, j:j + 1] * fb_ref[j:j + 1, :]
    sin_ref[...] = jnp.sin(phase)
    cos_ref[...] = jnp.cos(phase)


def _wide_kernel(x_ref, freq_ref, out_ref, *, half_dim):
    # x_ref:    (TB, 1)        f32
    # freq_ref: (1, half_dim)  f32   (grid-invariant)
    # out_ref:  (TB, dim)      f32   (half_dim % 128 == 0 -> both stores aligned)
    phase = x_ref[...] * freq_ref[...]
    out_ref[:, :half_dim] = jnp.sin(phase)
    out_ref[:, half_dim:] = jnp.cos(phase)


# --------------------------------------------------------------------------- #
# Tiling helper (budgets the PADDED per-row footprint, double-buffered)
# --------------------------------------------------------------------------- #
def _pick_tile_rows(num_rows, bytes_per_row, *, budget_bytes=12 * 1024 * 1024,
                    max_rows=4096):
    t = budget_bytes // (2 * bytes_per_row)          # 2x: double buffering
    t = max(8, min(max_rows, (t // 8) * 8))
    # v7x megacore: keep >=2 (>=4 when possible) grid steps so "parallel" can
    # actually split tiles across the two TensorCores.
    if num_rows >= 32:
        steps = 4
    elif num_rows >= 16:
        steps = 2
    else:
        steps = 1
    per_step = -(-num_rows // steps)
    per_step = ((per_step + 7) // 8) * 8
    return min(t, max(8, per_step))


# --------------------------------------------------------------------------- #
# Wrapper
# --------------------------------------------------------------------------- #
def sinusoidal_pos_emb(x: jax.Array, dim: int) -> jax.Array:
    """x: (B,) timesteps -> (B, dim) float32 sinusoidal embedding."""
    assert x.ndim == 1
    assert dim % 2 == 0 and dim >= 2
    B = x.shape[0]
    hd = dim // 2

    # Frequencies exactly as the torch module (f32 throughout).
    idx = jnp.arange(hd, dtype=jnp.int32)
    expo = (2 * (idx // 2)).astype(jnp.float32) / jnp.float32(hd)
    freq = (1.0 / jnp.power(jnp.float32(0.0001), expo)).astype(jnp.float32)

    x32 = x.astype(jnp.float32)
    vmem_limit = 32 * 1024 * 1024

    r = 128 // math.gcd(hd, 128)          # batch rows packed per lane row
    wh = r * hd                           # packed lane width, multiple of 128

    if r == 1:
        # half_dim already a multiple of 128: plain 2-D (TB, dim) output,
        # both half-stores are lane-aligned and dense.
        tb = _pick_tile_rows(B, 4 * (128 + dim))      # x lane-padded to 128
        bp = -(-B // tb) * tb
        x2d = (jnp.pad(x32, (0, bp - B)) if bp != B else x32).reshape(bp, 1)

        out = pl.pallas_call(
            functools.partial(_wide_kernel, half_dim=hd),
            out_shape=jax.ShapeDtypeStruct((bp, dim), jnp.float32),
            grid=(bp // tb,),
            in_specs=[pl.BlockSpec((tb, 1), lambda i: (i, 0)),
                      pl.BlockSpec((1, hd), lambda i: (0, 0))],
            out_specs=pl.BlockSpec((tb, dim), lambda i: (i, 0)),
            compiler_params=pltpu.CompilerParams(
                dimension_semantics=("parallel",),
                vmem_limit_bytes=vmem_limit),
            cost_estimate=pl.CostEstimate(
                flops=bp * hd,
                transcendentals=bp * dim,
                bytes_accessed=4 * (bp + hd + bp * dim)),
        )(x2d, freq.reshape(1, hd))
        return out[:B] if bp != B else out

    # ---- packed path (half_dim < 128): lane-dense slabs ------------------- #
    g0 = -(-B // r)                                   # packed rows needed
    tg = _pick_tile_rows(g0, 4 * (128 + 2 * wh))      # x pad + sin + cos rows
    gp = -(-g0 // tg) * tg
    bp = gp * r
    x_pad = jnp.pad(x32, (0, bp - B)) if bp != B else x32
    x_packed = x_pad.reshape(gp, r)

    # Block-masked frequency table: row j holds freq in its own dim-slot.
    lane_blk = jnp.arange(wh, dtype=jnp.int32) // hd
    fb = jnp.where(lane_blk[None, :] == jnp.arange(r, dtype=jnp.int32)[:, None],
                   jnp.tile(freq, r)[None, :],
                   jnp.float32(0.0)).astype(jnp.float32)

    sin_p, cos_p = pl.pallas_call(
        functools.partial(_packed_kernel, r=r),
        out_shape=(jax.ShapeDtypeStruct((gp, wh), jnp.float32),
                   jax.ShapeDtypeStruct((gp, wh), jnp.float32)),
        grid=(gp // tg,),
        in_specs=[pl.BlockSpec((tg, r), lambda i: (i, 0)),
                  pl.BlockSpec((r, wh), lambda i: (0, 0))],   # grid-invariant
        out_specs=(pl.BlockSpec((tg, wh), lambda i: (i, 0)),
                   pl.BlockSpec((tg, wh), lambda i: (i, 0))),
        compiler_params=pltpu.CompilerParams(
            dimension_semantics=("parallel",),
            vmem_limit_bytes=vmem_limit),
        cost_estimate=pl.CostEstimate(
            flops=gp * wh * (2 * r - 1),
            transcendentals=2 * gp * wh,
            bytes_accessed=4 * (gp * r + r * wh + 2 * gp * wh)),
    )(x_packed, fb)

    # (gp, wh) row-major == (bp, hd) row-major -> contiguous 2-D unpack.
    out = jnp.concatenate([sin_p.reshape(bp, hd), cos_p.reshape(bp, hd)], axis=-1)
    return out[:B] if bp != B else out


# --------------------------------------------------------------------------- #
# Reference & self-test
# --------------------------------------------------------------------------- #
def _reference(x: jax.Array, dim: int) -> jax.Array:
    hd = dim // 2
    idx = jnp.arange(hd, dtype=jnp.int32)
    expo = (2 * (idx // 2)).astype(jnp.float32) / jnp.float32(hd)
    freq = 1.0 / jnp.power(jnp.float32(0.0001), expo)
    emb = x.astype(jnp.float32)[:, None] * freq[None, :]
    return jnp.concatenate([jnp.sin(emb), jnp.cos(emb)], axis=-1)


if __name__ == "__main__":
    # Tolerance note: this module's freqs reach ~1e3-1e4, so sin/cos arguments
    # are far outside [0, 2pi); f32 range reduction differences between the
    # XLA reference and the in-kernel lowering can reach ~1e-4, hence 1e-3.
    k1, k2, k3 = jax.random.split(jax.random.PRNGKey(0), 3)
    atol = rtol = 1e-3

    # Case 1: small batch, dim=32 (packed path, r=8, single grid step).
    B1, d1 = 20, 32
    x1 = jax.random.uniform(k1, (B1,), dtype=jnp.float32, minval=0.0, maxval=1.0)
    o1 = jax.block_until_ready(sinusoidal_pos_emb(x1, d1))
    assert o1.shape == (B1, d1) and o1.dtype == jnp.float32
    assert jnp.allclose(o1, _reference(x1, d1), atol=atol, rtol=rtol)

    # Case 2: dim=32 with a bigger batch -> grid > 1 + row padding exercised.
    B2, d2 = 200, 32
    x2 = jax.random.uniform(k2, (B2,), dtype=jnp.float32, minval=0.0, maxval=1.0)
    o2 = jax.block_until_ready(sinusoidal_pos_emb(x2, d2))
    assert o2.shape == (B2, d2) and o2.dtype == jnp.float32
    assert jnp.allclose(o2, _reference(x2, d2), atol=atol, rtol=rtol)

    # Case 3: dim=256 -> wide path (half_dim % 128 == 0, single 2-D output).
    B3, d3 = 48, 256
    x3 = jax.random.uniform(k3, (B3,), dtype=jnp.float32, minval=0.0, maxval=1.0)
    o3 = jax.block_until_ready(sinusoidal_pos_emb(x3, d3))
    assert o3.shape == (B3, d3) and o3.dtype == jnp.float32
    assert jnp.allclose(o3, _reference(x3, d3), atol=atol, rtol=rtol)

    print("KERNEL_OK")
</pallas_src>

<mosaic_0001>
module attributes {stable_mosaic.version = 11 : i64} {
  func.func @_packed_kernel(%arg0: i32, %arg1: memref<8x8xf32, #tpu.memory_space<vmem>>, %arg2: memref<8x128xf32, #tpu.memory_space<vmem>>, %arg3: memref<8x128xf32, #tpu.memory_space<vmem>>, %arg4: memref<8x128xf32, #tpu.memory_space<vmem>>) attributes {dimension_semantics = [#tpu.dimension_semantics<parallel>], iteration_bounds = array<i64: 1>, scalar_prefetch = 0 : i64, scratch_operands = 0 : i64, tpu.core_type = #tpu.core_type<tc>, window_params = [{transform_indices = @transform_0, window_bounds = array<i64: 8, 8>}, {pipeline_mode = #tpu.pipeline_mode<synchronous>, transform_indices = @transform_1, window_bounds = array<i64: 8, 128>}, {transform_indices = @transform_2, window_bounds = array<i64: 8, 128>}, {transform_indices = @transform_3, window_bounds = array<i64: 8, 128>}]} {
    %c0 = arith.constant 0 : index
    %c0_0 = arith.constant 0 : index
    %0 = vector.load %arg1[%c0, %c0_0] : memref<8x8xf32, #tpu.memory_space<vmem>>, vector<8x8xf32>
    %1 = vector.extract_strided_slice %0 {offsets = [0, 0], sizes = [8, 1], strides = [1, 1]} : vector<8x8xf32> to vector<8x1xf32>
    %c0_1 = arith.constant 0 : index
    %c0_2 = arith.constant 0 : index
    %2 = vector.load %arg2[%c0_1, %c0_2] : memref<8x128xf32, #tpu.memory_space<vmem>>, vector<1x128xf32>
    %3 = vector.broadcast %1 : vector<8x1xf32> to vector<8x128xf32>
    %4 = vector.broadcast %2 : vector<1x128xf32> to vector<8x128xf32>
    %5 = arith.mulf %3, %4 : vector<8x128xf32>
    %6 = vector.extract_strided_slice %0 {offsets = [0, 1], sizes = [8, 1], strides = [1, 1]} : vector<8x8xf32> to vector<8x1xf32>
    %c1 = arith.constant 1 : index
    %c0_3 = arith.constant 0 : index
    %7 = vector.load %arg2[%c1, %c0_3] : memref<8x128xf32, #tpu.memory_space<vmem>>, vector<1x128xf32>
    %8 = vector.broadcast %6 : vector<8x1xf32> to vector<8x128xf32>
    %9 = vector.broadcast %7 : vector<1x128xf32> to vector<8x128xf32>
    %10 = arith.mulf %8, %9 : vector<8x128xf32>
    %11 = arith.addf %5, %10 : vector<8x128xf32>
    %12 = vector.extract_strided_slice %0 {offsets = [0, 2], sizes = [8, 1], strides = [1, 1]} : vector<8x8xf32> to vector<8x1xf32>
    %c2 = arith.constant 2 : index
    %c0_4 = arith.constant 0 : index
    %13 = vector.load %arg2[%c2, %c0_4] : memref<8x128xf32, #tpu.memory_space<vmem>>, vector<1x128xf32>
    %14 = vector.broadcast %12 : vector<8x1xf32> to vector<8x128xf32>
    %15 = vector.broadcast %13 : vector<1x128xf32> to vector<8x128xf32>
    %16 = arith.mulf %14, %15 : vector<8x128xf32>
    %17 = arith.addf %11, %16 : vector<8x128xf32>
    %18 = vector.extract_strided_slice %0 {offsets = [0, 3], sizes = [8, 1], strides = [1, 1]} : vector<8x8xf32> to vector<8x1xf32>
    %c3 = arith.constant 3 : index
    %c0_5 = arith.constant 0 : index
    %19 = vector.load %arg2[%c3, %c0_5] : memref<8x128xf32, #tpu.memory_space<vmem>>, vector<1x128xf32>
    %20 = vector.broadcast %18 : vector<8x1xf32> to vector<8x128xf32>
    %21 = vector.broadcast %19 : vector<1x128xf32> to vector<8x128xf32>
    %22 = arith.mulf %20, %21 : vector<8x128xf32>
    %23 = arith.addf %17, %22 : vector<8x128xf32>
    %24 = vector.extract_strided_slice %0 {offsets = [0, 4], sizes = [8, 1], strides = [1, 1]} : vector<8x8xf32> to vector<8x1xf32>
    %c4 = arith.constant 4 : index
    %c0_6 = arith.constant 0 : index
    %25 = vector.load %arg2[%c4, %c0_6] : memref<8x128xf32, #tpu.memory_space<vmem>>, vector<1x128xf32>
    %26 = vector.broadcast %24 : vector<8x1xf32> to vector<8x128xf32>
    %27 = vector.broadcast %25 : vector<1x128xf32> to vector<8x128xf32>
    %28 = arith.mulf %26, %27 : vector<8x128xf32>
    %29 = arith.addf %23, %28 : vector<8x128xf32>
    %30 = vector.extract_strided_slice %0 {offsets = [0, 5], sizes = [8, 1], strides = [1, 1]} : vector<8x8xf32> to vector<8x1xf32>
    %c5 = arith.constant 5 : index
    %c0_7 = arith.constant 0 : index
    %31 = vector.load %arg2[%c5, %c0_7] : memref<8x128xf32, #tpu.memory_space<vmem>>, vector<1x128xf32>
    %32 = vector.broadcast %30 : vector<8x1xf32> to vector<8x128xf32>
    %33 = vector.broadcast %31 : vector<1x128xf32> to vector<8x128xf32>
    %34 = arith.mulf %32, %33 : vector<8x128xf32>
    %35 = arith.addf %29, %34 : vector<8x128xf32>
    %36 = vector.extract_strided_slice %0 {offsets = [0, 6], sizes = [8, 1], strides = [1, 1]} : vector<8x8xf32> to vector<8x1xf32>
    %c6 = arith.constant 6 : index
    %c0_8 = arith.constant 0 : index
    %37 = vector.load %arg2[%c6, %c0_8] : memref<8x128xf32, #tpu.memory_space<vmem>>, vector<1x128xf32>
    %38 = vector.broadcast %36 : vector<8x1xf32> to vector<8x128xf32>
    %39 = vector.broadcast %37 : vector<1x128xf32> to vector<8x128xf32>
    %40 = arith.mulf %38, %39 : vector<8x128xf32>
    %41 = arith.addf %35, %40 : vector<8x128xf32>
    %42 = vector.extract_strided_slice %0 {offsets = [0, 7], sizes = [8, 1], strides = [1, 1]} : vector<8x8xf32> to vector<8x1xf32>
    %c7 = arith.constant 7 : index
    %c0_9 = arith.constant 0 : index
    %43 = vector.load %arg2[%c7, %c0_9] : memref<8x128xf32, #tpu.memory_space<vmem>>, vector<1x128xf32>
    %44 = vector.broadcast %42 : vector<8x1xf32> to vector<8x128xf32>
    %45 = vector.broadcast %43 : vector<1x128xf32> to vector<8x128xf32>
    %46 = arith.mulf %44, %45 : vector<8x128xf32>
    %47 = arith.addf %41, %46 : vector<8x128xf32>
    %48 = math.sin %47 : vector<8x128xf32>
    %c0_10 = arith.constant 0 : index
    %c0_11 = arith.constant 0 : index
    %49 = vector.load %arg3[%c0_10, %c0_11] : memref<8x128xf32, #tpu.memory_space<vmem>>, vector<8x128xf32>
    tpu.vector_store %arg3[%c0_10, %c0_11], %48 {strides = array<i32>} : memref<8x128xf32, #tpu.memory_space<vmem>>, vector<8x128xf32>,
    %50 = math.cos %47 : vector<8x128xf32>
    %c0_12 = arith.constant 0 : index
    %c0_13 = arith.constant 0 : index
    %51 = vector.load %arg4[%c0_12, %c0_13] : memref<8x128xf32, #tpu.memory_space<vmem>>, vector<8x128xf32>
    tpu.vector_store %arg4[%c0_12, %c0_13], %50 {strides = array<i32>} : memref<8x128xf32, #tpu.memory_space<vmem>>, vector<8x128xf32>,
    return
  }
  func.func @transform_0(%arg0: i32) -> (i32, i32) {
    %c0_i32 = arith.constant 0 : i32
    %c0_i32_0 = arith.constant 0 : i32
    return %arg0, %c0_i32 : i32, i32
  }
  func.func @transform_1(%arg0: i32) -> (i32, i32) {
    %c0_i32 = arith.constant 0 : i32
    %c0_i32_0 = arith.constant 0 : i32
    %c0_i32_1 = arith.constant 0 : i32
    return %c0_i32, %c0_i32_0 : i32, i32
  }
  func.func @transform_2(%arg0: i32) -> (i32, i32) {
    %c0_i32 = arith.constant 0 : i32
    %c0_i32_0 = arith.constant 0 : i32
    return %arg0, %c0_i32 : i32, i32
  }
  func.func @transform_3(%arg0: i32) -> (i32, i32) {
    %c0_i32 = arith.constant 0 : i32
    %c0_i32_0 = arith.constant 0 : i32
    return %arg0, %c0_i32 : i32, i32
  }
}

</mosaic_0001>

<llo_original>
// kernel: tpu_custom_call.1
$region0: #{tpu_custom_call.1}
  #allocation0 [shape = 'u32[]', space=smem, size = 0x4, offset = 0x4, fixed_abs, tag = 'smem constant byte address 0x4 - core index']
  #allocation1 [shape = 'u32[72,128]{1,0:T(1,128)}', space=vmem, size = 0x9000, scoped, tag = 'internal scratch']
  %s0 = inlined_call_operand.hbm [shape: f32[8,8], index: 0, kind: input, shape index: {}]
  %s1 = inlined_call_operand.hbm [shape: f32[8,128], index: 1, kind: input, shape index: {}]
  %s2 = inlined_call_operand.hbm [shape: f32[8,128], index: 2, kind: output, shape index: {0}]
  %s3 = inlined_call_operand.hbm [shape: f32[8,128], index: 3, kind: output, shape index: {1}]
  %4 = xla_tuple %s2, %s3
  %s5 = sld [smem:[#allocation0]]
  $region34: #{tpu_custom_call.1} parent=0
    _
  %s7 = ssub.s32 1, %s5
  %s8 = scalar_select 0, %s7, %s5
  $region1: #{tpu_custom_call.1} parent=0
    #allocation2 [shape = 'u8[4096]{0}', space=vmem, size = 0x1000, scoped, tag = 'input window, operand 0, single buffered']
    #allocation3 [shape = 's32[1]{0}', space=sflag, size = 0x4, scoped, tag = 'scoped memory for tpu_custom_call.1']
    #allocation4 [shape = 's32[1]{0}', space=sflag, size = 0x4, scoped, tag = 'scoped memory for tpu_custom_call.1']
    #allocation5 [shape = 'u8[4096]{0}', space=vmem, size = 0x1000, scoped, tag = 'input window, operand 1, single buffered']
    #allocation6 [shape = 's32[1]{0}', space=sflag, size = 0x4, scoped, tag = 'scoped memory for tpu_custom_call.1']
    #allocation7 [shape = 'u8[4096]{0}', space=vmem, size = 0x1000, scoped, tag = 'output window, operand 0, single buffered']
    #allocation8 [shape = 'u8[4096]{0}', space=vmem, size = 0x1000, scoped, tag = 'output window, operand 1, single buffered']
    #allocation9 [shape = 's32[1]{0}', space=sflag, size = 0x4, scoped, tag = 'scoped memory for tpu_custom_call.1']
    %9 = vsyncpa [#allocation3], 0
    %10 = vsyncpa [#allocation6], 0
    %11 = vsyncpa [#allocation4], 0
    %12 = vsyncpa [#allocation9], 0
    // Predicated region
    $region2: #{tpu_custom_call.1} parent=1 // pred_check
      _
    $region3: #{tpu_custom_call.1} parent=1 // pred_check_branch
      %14 = sbr.rel (0) target = $region5
    $region4: #{tpu_custom_call.1} parent=1 // pred_region
      %16 = vsyncadd [#allocation3], 0
      %s18 = sshll.u32 %s0, 4
      %s19 = int_to_ptr.hbm [resolvable:$true] %s18
      %s20 = sshll.u32 [#allocation2], 4
      %s21 = int_to_ptr.vmem [resolvable:$true] %s20
      %23 = dma.hbm_to_vmem [thread:$0]  %s19, 128, %s21, [#allocation3]
    $region5: #{tpu_custom_call.1} parent=1 // pred_fallthru
      _
    // Predicated region
    $region6: #{tpu_custom_call.1} parent=1 // pred_check
      _
    $region7: #{tpu_custom_call.1} parent=1 // pred_check_branch
      %25 = sbr.rel (0) target = $region9
    $region8: #{tpu_custom_call.1} parent=1 // pred_region
      %27 = vsyncadd [#allocation6], 0
      %s29 = sshll.u32 %s1, 4
      %s30 = int_to_ptr.hbm [resolvable:$true] %s29
      %s31 = sshll.u32 [#allocation5], 4
      %s32 = int_to_ptr.vmem [resolvable:$true] %s31
      %34 = dma.hbm_to_vmem [thread:$0]  %s30, 128, %s32, [#allocation6]
    $region9: #{tpu_custom_call.1} parent=1 // pred_fallthru
      _
    // Predicated region
    $region10: #{tpu_custom_call.1} parent=1 // pred_check
      _
    $region11: #{tpu_custom_call.1} parent=1 // pred_check_branch
      %36 = sbr.rel (0) target = $region13
    $region12: #{tpu_custom_call.1} parent=1 // pred_region
      %38 = dma.done [#allocation3], 128
    $region13: #{tpu_custom_call.1} parent=1 // pred_fallthru
      _
    // Predicated region
    $region14: #{tpu_custom_call.1} parent=1 // pred_check
      _
    $region15: #{tpu_custom_call.1} parent=1 // pred_check_branch
      %40 = sbr.rel (0) target = $region17
    $region16: #{tpu_custom_call.1} parent=1 // pred_region
      %42 = dma.done [#allocation6], 128
    $region17: #{tpu_custom_call.1} parent=1 // pred_fallthru
      _
    %v43 = vld [vmem:[#allocation2] sm:$0xff]
    %v44 = vld [vmem:[#allocation5] sm:$0x1]
    %46 = vset.pattern.permute.xlu0 0
    %47 = vperm.xlu0 %46, %v43
    %v48 = vpop.permute.xlu0 %47
    %v50 = vperm.slane %v44, 0
    %v51 = vmul.f32 %v48, %v50
    %v52 = vld [vmem:[#allocation5 + $0x1] sm:$0x1]
    %53 = vset.pattern.permute.xlu0 1
    %54 = vperm.xlu0 %53, %v43
    %v55 = vpop.permute.xlu0 %54
    %v57 = vperm.slane %v52, 0
    %v58 = vmul.f32 %v55, %v57
    %v59 = vadd.f32 %v51, %v58
    %v60 = vld [vmem:[#allocation5 + $0x2] sm:$0x1]
    %61 = vset.pattern.permute.xlu0 2
    %62 = vperm.xlu0 %61, %v43
    %v63 = vpop.permute.xlu0 %62
    %v65 = vperm.slane %v60, 0
    %v66 = vmul.f32 %v63, %v65
    %v67 = vadd.f32 %v59, %v66
    %v68 = vld [vmem:[#allocation5 + $0x3] sm:$0x1]
    %69 = vset.pattern.permute.xlu0 3
    %70 = vperm.xlu0 %69, %v43
    %v71 = vpop.permute.xlu0 %70
    %v73 = vperm.slane %v68, 0
    %v74 = vmul.f32 %v71, %v73
    %v75 = vadd.f32 %v67, %v74
    %v76 = vld [vmem:[#allocation5 + $0x4] sm:$0x1]
    %77 = vset.pattern.permute.xlu0 4
    %78 = vperm.xlu0 %77, %v43
    %v79 = vpop.permute.xlu0 %78
    %v81 = vperm.slane %v76, 0
    %v82 = vmul.f32 %v79, %v81
    %v83 = vadd.f32 %v75, %v82
    %v84 = vld [vmem:[#allocation5 + $0x5] sm:$0x1]
    %85 = vset.pattern.permute.xlu0 5
    %86 = vperm.xlu0 %85, %v43
    %v87 = vpop.permute.xlu0 %86
    %v89 = vperm.slane %v84, 0
    %v90 = vmul.f32 %v87, %v89
    %v91 = vadd.f32 %v83, %v90
    %v92 = vld [vmem:[#allocation5 + $0x6] sm:$0x1]
    %93 = vset.pattern.permute.xlu0 6
    %94 = vperm.xlu0 %93, %v43
    %v95 = vpop.permute.xlu0 %94
    %v97 = vperm.slane %v92, 0
    %v98 = vmul.f32 %v95, %v97
    %v99 = vadd.f32 %v91, %v98
    %v100 = vld [vmem:[#allocation5 + $0x7] sm:$0x1]
    %101 = vset.pattern.permute.xlu0 7
    %102 = vperm.xlu0 %101, %v43
    %v103 = vpop.permute.xlu0 %102
    %v105 = vperm.slane %v100, 0
    %v106 = vmul.f32 %v103, %v105
    %v107 = vadd.f32 %v99, %v106
    %v108 = vand.u32 2147483647, %v107
    %vm109 = vcmp.le.f32.partialorder %v108, 0.7853982
    %vm110 = vcmp.lt.s32.totalorder %v107, 0
    %v111 = vand.u32 %v107, 2139095040
    %v112 = vshrl.u32 %v111, 23
    %v113 = vsub.s32 %v112, 127
    %v114 = vand.u32 2147483647, %v107
    %v115 = vand.u32 %v114, 8388607
    %v116 = vor.u32 %v115, 8388608
    %v117 = vsub.s32 0, %v116
    %v118 = vadd.s32 %v113, 1
    %vm119 = vcmp.gt.s32.totalorder %v118, 0
    %v120 = vsel %vm119, %v118, 0
    %v121 = vshrl.u32 %v120, 5
    %v122 = vand.u32 %v120, 31
    %v123 = vsub.s32 32, %v122
    %v124 = vshrl.u32 683565275, %v123
    %v125 = vshll.u32 683565275, %v122
    %v126 = vshrl.u32 2475754826, %v123
    %v127 = vor.u32 %v125, %v126
    %v128 = vshll.u32 2475754826, %v122
    %v129 = vshrl.u32 2131351028, %v123
    %v130 = vor.u32 %v128, %v129
    %v131 = vshll.u32 2131351028, %v122
    %v132 = vshrl.u32 2102212464, %v123
    %v133 = vor.u32 %v131, %v132
    %v134 = vshll.u32 2102212464, %v122
    %v135 = vshrl.u32 920167782, %v123
    %v136 = vor.u32 %v134, %v135
    %v137 = vshll.u32 920167782, %v122
    %v138 = vshrl.u32 1326507024, %v123
    %v139 = vor.u32 %v137, %v138
    %vm140 = vcmp.lt.s32.totalorder %v121, 1
    %vm141 = vcmp.lt.s32.totalorder %v121, 2
    %vm142 = vcmp.lt.s32.totalorder %v121, 3
    %vm143 = vcmp.lt.s32.totalorder %v121, 4
    %v144 = vsel %vm140, %v124, %v127
    %v145 = vsel %vm143, %v133, 2102212464
    %v146 = vsel %vm142, %v130, %v145
    %v147 = vsel %vm141, %v144, %v146
    %v148 = vsel %vm140, %v127, %v130
    %v149 = vsel %vm143, %v136, 920167782
    %v150 = vsel %vm142, %v133, %v149
    %v151 = vsel %vm141, %v148, %v150
    %v152 = vsel %vm140, %v130, %v133
    %v153 = vsel %vm143, %v139, 1326507024
    %v154 = vsel %vm142, %v136, %v153
    %v155 = vsel %vm141, %v152, %v154
    %v156 = vshll.u32 %v116, 8
    %v157 = vand.u32 %v156, 65535
    %v158 = vshrl.u32 %v156, 16
    %v159 = vand.u32 %v155, 65535
    %v160 = vshrl.u32 %v155, 16
    %v161 = vmul.u32 %v157, %v159
    %v162 = vmul.u32 %v157, %v160
    %v163 = vmul.u32 %v158, %v159
    %v164 = vmul.u32 %v158, %v160
    %v165 = vshll.u32 %v162, 16
    %v166 = vshrl.u32 %v162, 16
    %v167 = vshll.u32 %v163, 16
    %v168 = vshrl.u32 %v163, 16
    %vm169 = vc.u32 %v161, %v165
    %v170 = vsel %vm169, 1, 0
    %v171 = vadd.s32 %v161, %v165
    %v172 = vadd.s32 %v164, %v170
    %vm173 = vc.u32 %v171, %v167
    %v174 = vsel %vm173, 1, 0
    %v175 = vadd.s32 %v171, %v167
    %v176 = vadd.s32 %v172, %v174
    %v177 = vadd.s32 %v176, %v166
    %v178 = vadd.s32 %v177, %v168
    %v179 = vand.u32 %v156, 65535
    %v180 = vshrl.u32 %v156, 16
    %v181 = vand.u32 %v151, 65535
    %v182 = vshrl.u32 %v151, 16
    %v183 = vmul.u32 %v179, %v181
    %v184 = vmul.u32 %v179, %v182
    %v185 = vmul.u32 %v180, %v181
    %v186 = vmul.u32 %v180, %v182
    %v187 = vshll.u32 %v184, 16
    %v188 = vshrl.u32 %v184, 16
    %v189 = vshll.u32 %v185, 16
    %v190 = vshrl.u32 %v185, 16
    %vm191 = vc.u32 %v183, %v187
    %v192 = vsel %vm191, 1, 0
    %v193 = vadd.s32 %v183, %v187
    %v194 = vadd.s32 %v186, %v192
    %vm195 = vc.u32 %v193, %v189
    %v196 = vsel %vm195, 1, 0
    %v197 = vadd.s32 %v193, %v189
    %v198 = vadd.s32 %v194, %v196
    %v199 = vadd.s32 %v198, %v188
    %v200 = vadd.s32 %v199, %v190
    %v201 = vmul.u32 %v156, %v147
    %v202 = vadd.s32 %v178, %v197
    %vm203 = vc.u32 %v178, %v197
    %v204 = vadd.s32 %v200, 1
    %v205 = vsel %vm203, %v204, %v200
    %v206 = vadd.s32 %v201, %v205
    %v207 = vadd.s32 %v206, 536870912
    %v208 = vshrl.u32 %v207, 30
    %v209 = vshll.u32 %v208, 30
    %v210 = vsub.s32 %v206, %v209
    %vm211 = vcmp.lt.s32.totalorder %v210, 0
    %v212 = vsub.s32 0, %v210
    %v213 = vsel %vm211, %v212, %v210
    %v214 = vclz %v213
    %v215 = vsub.s32 %v214, 2
    %vm216 = vcmp.gt.s32.totalorder 0, %v215
    %v217 = vsel %vm216, 0, %v215
    %v218 = vsub.s32 32, %v217
    %v219 = vshll.u32 %v210, %v217
    %v220 = vshrl.u32 %v202, %v218
    %v221 = vor.u32 %v219, %v220
    %v222 = vsub.s32 4294967266, %v217
    %v223 = vadd.s32 %v222, 127
    %v224 = vshll.u32 %v223, 23
    %v225 = vor.u32 4788187, %v224
    %v226 = vand.u32 2147483647, %v225
    %v228 = vcvt.s32.f32 %v221
    %v229 = vmul.f32 %v228, %v226
    %v230 = vxor.u32 %v229, 2147483648
    %v231 = vsel %vm110, %v230, %v229
    %v232 = vsub.s32 4, %v208
    %v233 = vsel %vm110, %v232, %v208
    %v234 = vsel %vm109, %v107, %v231
    %v235 = vsel %vm109, 0, %v233
    %v236 = vmul.f32 %v234, %v234
    %v237 = vmul.f32 %v236, -0.001358992
    %v238 = vadd.f32 %v237, 0.041655596
    %v239 = vmul.f32 %v236, %v238
    %v240 = vadd.f32 %v239, -0.4999988
    %v241 = vmul.f32 %v236, %v240
    %v242 = vadd.f32 1.0, %v241
    %v243 = vmul.f32 %v234, %v234
    %v244 = vmul.f32 %v243, -0.00019511016
    %v245 = vadd.f32 %v244, 0.008332121
    %v246 = vmul.f32 %v243, %v245
    %v247 = vadd.f32 %v246, -0.16666654
    %v248 = vmul.f32 %v243, %v247
    %v249 = vadd.f32 %v248, 1.0
    %v250 = vmul.f32 %v249, %v234
    %vm251 = vweird.f32 %v107
    %v252 = vadd.s32 %v235, 3
    %v253 = vand.u32 %v252, 3
    %vm254 = vcmp.lt.s32.totalorder %v253, 2
    %vm255 = vcmp.eq.s32.totalorder %v253, 0
    %v256 = vxor.u32 %v250, 2147483648
    %v257 = vsel %vm255, %v242, %v256
    %vm258 = vcmp.eq.s32.totalorder %v253, 2
    %v259 = vxor.u32 %v242, 2147483648
    %v260 = vsel %vm258, %v259, %v250
    %v261 = vsel %vm254, %v257, %v260
    %v262 = vsel %vm251, nan, %v261
    %263 = vst [vmem:[#allocation7] sm:$0xff] %v262
    %v264 = vand.u32 2147483647, %v107
    %vm265 = vcmp.le.f32.partialorder %v264, 0.7853982
    %vm266 = vcmp.lt.s32.totalorder %v107, 0
    %v267 = vand.u32 %v107, 2139095040
    %v268 = vshrl.u32 %v267, 23
    %v269 = vsub.s32 %v268, 127
    %v270 = vand.u32 2147483647, %v107
    %v271 = vand.u32 %v270, 8388607
    %v272 = vor.u32 %v271, 8388608
    %v273 = vsub.s32 0, %v272
    %v274 = vadd.s32 %v269, 1
    %vm275 = vcmp.gt.s32.totalorder %v274, 0
    %v276 = vsel %vm275, %v274, 0
    %v277 = vshrl.u32 %v276, 5
    %v278 = vand.u32 %v276, 31
    %v279 = vsub.s32 32, %v278
    %v280 = vshrl.u32 683565275, %v279
    %v281 = vshll.u32 683565275, %v278
    %v282 = vshrl.u32 2475754826, %v279
    %v283 = vor.u32 %v281, %v282
    %v284 = vshll.u32 2475754826, %v278
    %v285 = vshrl.u32 2131351028, %v279
    %v286 = vor.u32 %v284, %v285
    %v287 = vshll.u32 2131351028, %v278
    %v288 = vshrl.u32 2102212464, %v279
    %v289 = vor.u32 %v287, %v288
    %v290 = vshll.u32 2102212464, %v278
    %v291 = vshrl.u32 920167782, %v279
    %v292 = vor.u32 %v290, %v291
    %v293 = vshll.u32 920167782, %v278
    %v294 = vshrl.u32 1326507024, %v279
    %v295 = vor.u32 %v293, %v294
    %vm296 = vcmp.lt.s32.totalorder %v277, 1
    %vm297 = vcmp.lt.s32.totalorder %v277, 2
    %vm298 = vcmp.lt.s32.totalorder %v277, 3
    %vm299 = vcmp.lt.s32.totalorder %v277, 4
    %v300 = vsel %vm296, %v280, %v283
    %v301 = vsel %vm299, %v289, 2102212464
    %v302 = vsel %vm298, %v286, %v301
    %v303 = vsel %vm297, %v300, %v302
    %v304 = vsel %vm296, %v283, %v286
    %v305 = vsel %vm299, %v292, 920167782
    %v306 = vsel %vm298, %v289, %v305
    %v307 = vsel %vm297, %v304, %v306
    %v308 = vsel %vm296, %v286, %v289
    %v309 = vsel %vm299, %v295, 1326507024
    %v310 = vsel %vm298, %v292, %v309
    %v311 = vsel %vm297, %v308, %v310
    %v312 = vshll.u32 %v272, 8
    %v313 = vand.u32 %v312, 65535
    %v314 = vshrl.u32 %v312, 16
    %v315 = vand.u32 %v311, 65535
    %v316 = vshrl.u32 %v311, 16
    %v317 = vmul.u32 %v313, %v315
    %v318 = vmul.u32 %v313, %v316
    %v319 = vmul.u32 %v314, %v315
    %v320 = vmul.u32 %v314, %v316
    %v321 = vshll.u32 %v318, 16
    %v322 = vshrl.u32 %v318, 16
    %v323 = vshll.u32 %v319, 16
    %v324 = vshrl.u32 %v319, 16
    %vm325 = vc.u32 %v317, %v321
    %v326 = vsel %vm325, 1, 0
    %v327 = vadd.s32 %v317, %v321
    %v328 = vadd.s32 %v320, %v326
    %vm329 = vc.u32 %v327, %v323
    %v330 = vsel %vm329, 1, 0
    %v331 = vadd.s32 %v327, %v323
    %v332 = vadd.s32 %v328, %v330
    %v333 = vadd.s32 %v332, %v322
    %v334 = vadd.s32 %v333, %v324
    %v335 = vand.u32 %v312, 65535
    %v336 = vshrl.u32 %v312, 16
    %v337 = vand.u32 %v307, 65535
    %v338 = vshrl.u32 %v307, 16
    %v339 = vmul.u32 %v335, %v337
    %v340 = vmul.u32 %v335, %v338
    %v341 = vmul.u32 %v336, %v337
    %v342 = vmul.u32 %v336, %v338
    %v343 = vshll.u32 %v340, 16
    %v344 = vshrl.u32 %v340, 16
    %v345 = vshll.u32 %v341, 16
    %v346 = vshrl.u32 %v341, 16
    %vm347 = vc.u32 %v339, %v343
    %v348 = vsel %vm347, 1, 0
    %v349 = vadd.s32 %v339, %v343
    %v350 = vadd.s32 %v342, %v348
    %vm351 = vc.u32 %v349, %v345
    %v352 = vsel %vm351, 1, 0
    %v353 = vadd.s32 %v349, %v345
    %v354 = vadd.s32 %v350, %v352
    %v355 = vadd.s32 %v354, %v344
    %v356 = vadd.s32 %v355, %v346
    %v357 = vmul.u32 %v312, %v303
    %v358 = vadd.s32 %v334, %v353
    %vm359 = vc.u32 %v334, %v353
    %v360 = vadd.s32 %v356, 1
    %v361 = vsel %vm359, %v360, %v356
    %v362 = vadd.s32 %v357, %v361
    %v363 = vadd.s32 %v362, 536870912
    %v364 = vshrl.u32 %v363, 30
    %v365 = vshll.u32 %v364, 30
    %v366 = vsub.s32 %v362, %v365
    %vm367 = vcmp.lt.s32.totalorder %v366, 0
    %v368 = vsub.s32 0, %v366
    %v369 = vsel %vm367, %v368, %v366
    %v370 = vclz %v369
    %v371 = vsub.s32 %v370, 2
    %vm372 = vcmp.gt.s32.totalorder 0, %v371
    %v373 = vsel %vm372, 0, %v371
    %v374 = vsub.s32 32, %v373
    %v375 = vshll.u32 %v366, %v373
    %v376 = vshrl.u32 %v358, %v374
    %v377 = vor.u32 %v375, %v376
    %v378 = vsub.s32 4294967266, %v373
    %v379 = vadd.s32 %v378, 127
    %v380 = vshll.u32 %v379, 23
    %v381 = vor.u32 4788187, %v380
    %v382 = vand.u32 2147483647, %v381
    %v384 = vcvt.s32.f32 %v377
    %v385 = vmul.f32 %v384, %v382
    %v386 = vxor.u32 %v385, 2147483648
    %v387 = vsel %vm266, %v386, %v385
    %v388 = vsub.s32 4, %v364
    %v389 = vsel %vm266, %v388, %v364
    %v390 = vsel %vm265, %v107, %v387
    %v391 = vsel %vm265, 0, %v389
    %v392 = vmul.f32 %v390, %v390
    %v393 = vmul.f32 %v392, -0.001358992
    %v394 = vadd.f32 %v393, 0.041655596
    %v395 = vmul.f32 %v392, %v394
    %v396 = vadd.f32 %v395, -0.4999988
    %v397 = vmul.f32 %v392, %v396
    %v398 = vadd.f32 1.0, %v397
    %v399 = vmul.f32 %v390, %v390
    %v400 = vmul.f32 %v399, -0.00019511016
    %v401 = vadd.f32 %v400, 0.008332121
    %v402 = vmul.f32 %v399, %v401
    %v403 = vadd.f32 %v402, -0.16666654
    %v404 = vmul.f32 %v399, %v403
    %v405 = vadd.f32 %v404, 1.0
    %v406 = vmul.f32 %v405, %v390
    %vm407 = vweird.f32 %v107
    %v408 = vand.u32 %v391, 3
    %vm409 = vcmp.lt.s32.totalorder %v408, 2
    %vm410 = vcmp.eq.s32.totalorder %v408, 0
    %v411 = vxor.u32 %v406, 2147483648
    %v412 = vsel %vm410, %v398, %v411
    %vm413 = vcmp.eq.s32.totalorder %v408, 2
    %v414 = vxor.u32 %v398, 2147483648
    %v415 = vsel %vm413, %v414, %v406
    %v416 = vsel %vm409, %v412, %v415
    %v417 = vsel %vm407, nan, %v416
    %418 = vst [vmem:[#allocation8] sm:$0xff] %v417
    // Predicated region
    $region18: #{tpu_custom_call.1} parent=1 // pred_check
      _
    $region19: #{tpu_custom_call.1} parent=1 // pred_check_branch
      %420 = sbr.rel (0) target = $region21
    $region20: #{tpu_custom_call.1} parent=1 // pred_region
      %422 = vsyncadd [#allocation4], 0
      %s424 = sshll.u32 [#allocation7], 4
      %s425 = int_to_ptr.vmem [resolvable:$true] %s424
      %s426 = sshll.u32 %s2, 4
      %s427 = int_to_ptr.hbm [resolvable:$true] %s426
      %429 = dma.vmem_to_hbm [thread:$0]  %s425, 128, %s427, [#allocation4]
    $region21: #{tpu_custom_call.1} parent=1 // pred_fallthru
      _
    // Predicated region
    $region22: #{tpu_custom_call.1} parent=1 // pred_check
      _
    $region23: #{tpu_custom_call.1} parent=1 // pred_check_branch
      %431 = sbr.rel (0) target = $region25
    $region24: #{tpu_custom_call.1} parent=1 // pred_region
      %433 = vsyncadd [#allocation9], 0
      %s435 = sshll.u32 [#allocation8], 4
      %s436 = int_to_ptr.vmem [resolvable:$true] %s435
      %s437 = sshll.u32 %s3, 4
      %s438 = int_to_ptr.hbm [resolvable:$true] %s437
      %440 = dma.vmem_to_hbm [thread:$0]  %s436, 128, %s438, [#allocation9]
    $region25: #{tpu_custom_call.1} parent=1 // pred_fallthru
      _
    // Predicated region
    $region26: #{tpu_custom_call.1} parent=1 // pred_check
      _
    $region27: #{tpu_custom_call.1} parent=1 // pred_check_branch
      %442 = sbr.rel (0) target = $region29
    $region28: #{tpu_custom_call.1} parent=1 // pred_region
      %444 = dma.done [#allocation4], 128
    $region29: #{tpu_custom_call.1} parent=1 // pred_fallthru
      _
    // Predicated region
    $region30: #{tpu_custom_call.1} parent=1 // pred_check
      _
    $region31: #{tpu_custom_call.1} parent=1 // pred_check_branch
      %446 = sbr.rel (0) target = $region33
    $region32: #{tpu_custom_call.1} parent=1 // pred_region
      %448 = dma.done [#allocation9], 128
    $region33: #{tpu_custom_call.1} parent=1 // pred_fallthru
      _
    %449 = vsyncpa [#allocation3], 1
    %450 = vsyncpa [#allocation6], 1
    %451 = vsyncpa [#allocation4], 1
    %452 = vsyncpa [#allocation9], 1

</llo_original>
